<compile_context>
chip_gen: v5e
topology: v5e:2x2
jax: 0.10.0
libtpu: 0.0.40
codegen_flags: <defaults>
</compile_context>

<pallas_src>
import jax
import jax.numpy as jnp
from jax.experimental import pallas as pl
from jax.experimental.pallas import tpu as pltpu


def _round_up(x: int, m: int) -> int:
    return ((x + m - 1) // m) * m


def _pick_tile(total: int, cap: int, unit: int) -> int:
    """Largest multiple of `unit` that divides `total` (itself a multiple of
    `unit`) and is <= cap.  Avoids padding beyond lane/sublane alignment."""
    q = total // unit
    best = 1
    d = 1
    while d * d <= q:
        if q % d == 0:
            for c in (d, q // d):
                if c * unit <= cap and c > best:
                    best = c
        d += 1
    return best * unit


def _linear_bias_kernel(x_ref, w_ref, b_ref, o_ref):
    # x_ref: (tm, tk)   w_ref: (tk, tn)   b_ref: (1, tn)   o_ref: (tm, tn) f32
    k = pl.program_id(2)

    @pl.when(k == 0)
    def _init():
        # Bias is the accumulator initializer -> no separate finalize pass.
        o_ref[...] = jnp.broadcast_to(b_ref[...], o_ref.shape)

    o_ref[...] += jnp.dot(x_ref[...], w_ref[...],
                          preferred_element_type=jnp.float32)


def _linear_nobias_kernel(x_ref, w_ref, o_ref):
    k = pl.program_id(2)

    @pl.when(k == 0)
    def _init():
        o_ref[...] = jnp.zeros_like(o_ref)

    o_ref[...] += jnp.dot(x_ref[...], w_ref[...],
                          preferred_element_type=jnp.float32)


def linear_forward(x, weight, bias=None, *, use_bf16=False):
    """y = x @ weight.T + bias  (torch.nn.Linear forward, PyTorch weight layout)."""
    B, In = x.shape
    Out, In2 = weight.shape
    assert In == In2, "weight must have shape (output_size, input_size)"
    orig_dtype = x.dtype

    # Padded problem sizes (sublane=8 on M, lane=128 on N/K).
    Mp = _round_up(B, 8)
    Np = _round_up(Out, 128)
    Kp = _round_up(In, 128)

    # --- Tile selection ---------------------------------------------------
    # Small/modest batch (the typical Linear regime): a single M tile means W
    # is streamed from HBM exactly once.  Otherwise take the largest divisor
    # tile <= 512.
    tm = Mp if Mp <= 512 else _pick_tile(Mp, 512, 8)
    tn = _pick_tile(Np, 512, 128)
    tk = _pick_tile(Kp, 2048, 128)

    # v7x megacore: keep >= 2 blocks along a "parallel" axis when possible so
    # both TensorCores get work (no-op on single-TC v5e/v6e).
    if Mp // tm == 1 and Np // tn == 1 and Np >= 256:
        tn = _pick_tile(Np, Np // 2, 128)

    grid = (Mp // tm, Np // tn, Kp // tk)
    grid_m, grid_n, grid_k = grid

    # --- Host-side relayout (only copy what actually needs it) -------------
    if Mp == B and Kp == In:
        xp = x
    else:
        xp = jnp.pad(x, ((0, Mp - B), (0, Kp - In)))

    # Pre-transpose W to (In, Out); fuses with the pad copy so the kernel's
    # RHS tile is already MXU-natural (k, n) and no in-kernel vxpose is needed.
    wt = weight.T
    if Kp == In and Np == Out:
        wp = wt
    else:
        wp = jnp.pad(wt, ((0, Kp - In), (0, Np - Out)))

    if use_bf16:
        xp = xp.astype(jnp.bfloat16)
        wp = wp.astype(jnp.bfloat16)

    has_bias = bias is not None
    if has_bias:
        bp = bias.astype(jnp.float32)
        if Np != Out:
            bp = jnp.pad(bp, (0, Np - Out))
        bp = bp.reshape(1, Np)

    # --- Cost / VMEM hints --------------------------------------------------
    in_elem = jnp.dtype(xp.dtype).itemsize
    bytes_accessed = (xp.size * grid_n + wp.size * grid_m) * in_elem + Mp * Np * 4
    if has_bias:
        bytes_accessed += Np * 4 * grid_m
    cost = pl.CostEstimate(
        flops=2 * Mp * Np * Kp,
        transcendentals=0,
        bytes_accessed=bytes_accessed,
    )

    # Double-buffered footprint: 2x(x+W) input tiles + 2x out tile (+ bias).
    footprint = (2 * (tm * tk + tk * tn) * in_elem
                 + 2 * (tm * tn) * 4
                 + (2 * Np * 4 if has_bias else 0))
    # <= 48 MiB keeps headroom even on v7x's 64 MiB physical VMEM.
    vmem_limit = min(max(32 * 1024 * 1024, int(footprint * 5 // 4)),
                     48 * 1024 * 1024)

    # --- pallas_call ----------------------------------------------------------
    in_specs = [
        pl.BlockSpec((tm, tk), lambda i, j, k: (i, k)),   # x tile  (m, k)
        pl.BlockSpec((tk, tn), lambda i, j, k: (k, j)),   # W^T tile (k, n)
    ]
    args = [xp, wp]
    if has_bias:
        in_specs.append(pl.BlockSpec((1, tn), lambda i, j, k: (0, j)))
        args.append(bp)
        kernel = _linear_bias_kernel
    else:
        kernel = _linear_nobias_kernel

    yp = pl.pallas_call(
        kernel,
        out_shape=jax.ShapeDtypeStruct((Mp, Np), jnp.float32),
        grid=grid,
        in_specs=in_specs,
        out_specs=pl.BlockSpec((tm, tn), lambda i, j, k: (i, j)),
        compiler_params=pltpu.CompilerParams(
            # M/N independent -> megacore-shardable; K is the reduction (last).
            dimension_semantics=("parallel", "parallel", "arbitrary"),
            vmem_limit_bytes=vmem_limit,
        ),
        cost_estimate=cost,
    )(*args)

    y = yp[:B, :Out]
    return y.astype(orig_dtype)


if __name__ == "__main__":
    key = jax.random.PRNGKey(0)

    def make_case(k, batch, input_size, output_size):
        kx, kw, kb = jax.random.split(k, 3)
        bound = 1.0 / (input_size ** 0.5)
        x = jax.random.normal(kx, (batch, input_size), dtype=jnp.float32)
        w = jax.random.uniform(kw, (output_size, input_size),
                               dtype=jnp.float32, minval=-bound, maxval=bound)
        b = jax.random.uniform(kb, (output_size,),
                               dtype=jnp.float32, minval=-bound, maxval=bound)
        return x, w, b

    def ref(x, w, b=None):
        y = jnp.dot(x, w.T, precision=jax.lax.Precision.HIGHEST)
        return y if b is None else y + b

    k1, k2, k3 = jax.random.split(key, 3)

    # Case 1: small shapes consistent with the module (batch=8, in=32, out=16).
    x1, w1, b1 = make_case(k1, 8, 32, 16)
    y1 = linear_forward(x1, w1, b1)
    jax.block_until_ready(y1)
    assert jnp.allclose(y1, ref(x1, w1, b1), atol=1e-4, rtol=1e-4)

    # Case 1b: bias=False path.
    y1n = linear_forward(x1, w1, None)
    jax.block_until_ready(y1n)
    assert jnp.allclose(y1n, ref(x1, w1), atol=1e-4, rtol=1e-4)

    # Case 2: non-aligned shapes exercising padding and a multi-tile N grid.
    x2, w2, b2 = make_case(k2, 40, 200, 300)
    y2 = linear_forward(x2, w2, b2)
    jax.block_until_ready(y2)
    assert jnp.allclose(y2, ref(x2, w2, b2), atol=1e-4, rtol=1e-4)

    # Case 3: larger aligned shapes exercising the K-reduction grid (grid_k > 1)
    # and the accumulate-into-output path.
    x3, w3, b3 = make_case(k3, 256, 4096, 512)
    y3 = linear_forward(x3, w3, b3)
    jax.block_until_ready(y3)
    assert jnp.allclose(y3, ref(x3, w3, b3), atol=1e-3, rtol=1e-3)

    print("KERNEL_OK")
</pallas_src>

<mosaic_0001>
module attributes {stable_mosaic.version = 11 : i64} {
  func.func @_linear_bias_kernel(%arg0: i32, %arg1: i32, %arg2: i32, %arg3: memref<8x128xf32, #tpu.memory_space<vmem>>, %arg4: memref<128x128xf32, #tpu.memory_space<vmem>>, %arg5: memref<1x128xf32, #tpu.memory_space<vmem>>, %arg6: memref<8x128xf32, #tpu.memory_space<vmem>>) attributes {dimension_semantics = [#tpu.dimension_semantics<parallel>, #tpu.dimension_semantics<parallel>, #tpu.dimension_semantics<arbitrary>], iteration_bounds = array<i64: 1, 1, 1>, scalar_prefetch = 0 : i64, scratch_operands = 0 : i64, tpu.core_type = #tpu.core_type<tc>, window_params = [{transform_indices = @transform_0, window_bounds = array<i64: 8, 128>}, {transform_indices = @transform_1, window_bounds = array<i64: 128, 128>}, {transform_indices = @transform_2, window_bounds = array<i64: 1, 128>}, {transform_indices = @transform_3, window_bounds = array<i64: 8, 128>}]} {
    %c0_i32 = arith.constant 0 : i32
    %0 = arith.cmpi eq, %arg2, %c0_i32 : i32
    %1 = arith.extui %0 : i1 to i32
    %c0_i32_0 = arith.constant 0 : i32
    %2 = arith.cmpi ne, %1, %c0_i32_0 : i32
    scf.if %2 {
      %c0_8 = arith.constant 0 : index
      %c0_9 = arith.constant 0 : index
      %9 = vector.load %arg5[%c0_8, %c0_9] : memref<1x128xf32, #tpu.memory_space<vmem>>, vector<1x128xf32>
      %10 = vector.shape_cast %9 : vector<1x128xf32> to vector<1x128xf32>
      %11 = vector.broadcast %10 : vector<1x128xf32> to vector<8x128xf32>
      %c0_10 = arith.constant 0 : index
      %c0_11 = arith.constant 0 : index
      %12 = vector.load %arg6[%c0_10, %c0_11] : memref<8x128xf32, #tpu.memory_space<vmem>>, vector<8x128xf32>
      tpu.vector_store %arg6[%c0_10, %c0_11], %11 {strides = array<i32>} : memref<8x128xf32, #tpu.memory_space<vmem>>, vector<8x128xf32>,
    } else {
    }
    %c0 = arith.constant 0 : index
    %c0_1 = arith.constant 0 : index
    %3 = vector.load %arg6[%c0, %c0_1] : memref<8x128xf32, #tpu.memory_space<vmem>>, vector<8x128xf32>
    %c0_2 = arith.constant 0 : index
    %c0_3 = arith.constant 0 : index
    %4 = vector.load %arg3[%c0_2, %c0_3] : memref<8x128xf32, #tpu.memory_space<vmem>>, vector<8x128xf32>
    %c0_4 = arith.constant 0 : index
    %c0_5 = arith.constant 0 : index
    %5 = vector.load %arg4[%c0_4, %c0_5] : memref<128x128xf32, #tpu.memory_space<vmem>>, vector<128x128xf32>
    %cst = arith.constant dense<0.000000e+00> : vector<8x128xf32>
    %6 = tpu.matmul %4, %5, %cst {dimension_numbers = #tpu.dot_dimension_numbers<[1], [0], [0], [1], [0, 0, 1, 1], [], []>} : vector<8x128xf32>, vector<128x128xf32>, vector<8x128xf32> -> vector<8x128xf32>
    %7 = arith.addf %3, %6 : vector<8x128xf32>
    %c0_6 = arith.constant 0 : index
    %c0_7 = arith.constant 0 : index
    %8 = vector.load %arg6[%c0_6, %c0_7] : memref<8x128xf32, #tpu.memory_space<vmem>>, vector<8x128xf32>
    tpu.vector_store %arg6[%c0_6, %c0_7], %7 {strides = array<i32>} : memref<8x128xf32, #tpu.memory_space<vmem>>, vector<8x128xf32>,
    return
  }
  func.func @transform_0(%arg0: i32, %arg1: i32, %arg2: i32) -> (i32, i32) {
    %c0_i32 = arith.constant 0 : i32
    return %arg0, %arg2 : i32, i32
  }
  func.func @transform_1(%arg0: i32, %arg1: i32, %arg2: i32) -> (i32, i32) {
    %c0_i32 = arith.constant 0 : i32
    return %arg2, %arg1 : i32, i32
  }
  func.func @transform_2(%arg0: i32, %arg1: i32, %arg2: i32) -> (i32, i32) {
    %c0_i32 = arith.constant 0 : i32
    %c0_i32_0 = arith.constant 0 : i32
    return %c0_i32, %arg1 : i32, i32
  }
  func.func @transform_3(%arg0: i32, %arg1: i32, %arg2: i32) -> (i32, i32) {
    %c0_i32 = arith.constant 0 : i32
    return %arg0, %arg1 : i32, i32
  }
}

</mosaic_0001>

<llo_original>
// kernel: tpu_custom_call.1
$region0: #{tpu_custom_call.1}
  #allocation0 [shape = 'u32[]', space=smem, size = 0x4, offset = 0x4, fixed_abs, tag = 'smem constant byte address 0x4 - core index']
  #allocation1 [shape = 'u32[72,128]{1,0:T(1,128)}', space=vmem, size = 0x9000, scoped, tag = 'internal scratch']
  %s0 = inlined_call_operand.hbm [shape: f32[8,128], index: 0, kind: input, shape index: {}]
  %s1 = inlined_call_operand.hbm [shape: f32[128,128], index: 1, kind: input, shape index: {}]
  %s2 = inlined_call_operand.vmem [shape: f32[1,128], index: 2, kind: input, shape index: {}]
  %s3 = inlined_call_operand.hbm [shape: f32[8,128], index: 3, kind: output, shape index: {}]
  %s4 = sld [smem:[#allocation0]]
  $region34: #{tpu_custom_call.1} parent=0
    _
  %s6 = ssub.s32 1, %s4
  %s7 = scalar_select 0, %s6, %s4
  $region1: #{tpu_custom_call.1} parent=0
    #allocation2 [shape = 'u8[4096]{0}', space=vmem, size = 0x1000, scoped, tag = 'input window, operand 0, single buffered']
    #allocation3 [shape = 's32[1]{0}', space=sflag, size = 0x4, scoped, tag = 'scoped memory for tpu_custom_call.1']
    #allocation4 [shape = 's32[1]{0}', space=sflag, size = 0x4, scoped, tag = 'scoped memory for tpu_custom_call.1']
    #allocation5 [shape = 'u8[65536]{0}', space=vmem, size = 0x10000, scoped, tag = 'input window, operand 1, single buffered']
    #allocation6 [shape = 's32[1]{0}', space=sflag, size = 0x4, scoped, tag = 'scoped memory for tpu_custom_call.1']
    #allocation7 [shape = 'u8[4096]{0}', space=vmem, size = 0x1000, scoped, tag = 'output window, operand 0, single buffered']
    %8 = vsyncpa [#allocation3], 0
    %9 = vsyncpa [#allocation6], 0
    %10 = vsyncpa [#allocation4], 0
    // Predicated region
    $region2: #{tpu_custom_call.1} parent=1 // pred_check
      _
    $region3: #{tpu_custom_call.1} parent=1 // pred_check_branch
      %12 = sbr.rel (0) target = $region5
    $region4: #{tpu_custom_call.1} parent=1 // pred_region
      %14 = vsyncadd [#allocation3], 0
      %s16 = sshll.u32 %s0, 4
      %s17 = int_to_ptr.hbm [resolvable:$true] %s16
      %s18 = sshll.u32 [#allocation2], 4
      %s19 = int_to_ptr.vmem [resolvable:$true] %s18
      %21 = dma.hbm_to_vmem [thread:$0]  %s17, 128, %s19, [#allocation3]
    $region5: #{tpu_custom_call.1} parent=1 // pred_fallthru
      _
    // Predicated region
    $region6: #{tpu_custom_call.1} parent=1 // pred_check
      _
    $region7: #{tpu_custom_call.1} parent=1 // pred_check_branch
      %23 = sbr.rel (0) target = $region9
    $region8: #{tpu_custom_call.1} parent=1 // pred_region
      %25 = vsyncadd [#allocation6], 0
      %s26 = sshll.u32 %s1, 4
      %s27 = int_to_ptr.hbm [resolvable:$true] %s26
      %s28 = sshll.u32 [#allocation5], 4
      %s29 = int_to_ptr.vmem [resolvable:$true] %s28
      %34 = dma.hbm_to_vmem [thread:$0]  %s27, 2048, %s29, [#allocation6], 128, 128, 8
    $region9: #{tpu_custom_call.1} parent=1 // pred_fallthru
      _
    // Predicated region
    $region10: #{tpu_custom_call.1} parent=1 // pred_check
      _
    $region11: #{tpu_custom_call.1} parent=1 // pred_check_branch
      %36 = sbr.rel (0) target = $region13
    $region12: #{tpu_custom_call.1} parent=1 // pred_region
      _
    $region13: #{tpu_custom_call.1} parent=1 // pred_fallthru
      _
    // Predicated region
    $region14: #{tpu_custom_call.1} parent=1 // pred_check
      _
    $region15: #{tpu_custom_call.1} parent=1 // pred_check_branch
      %38 = sbr.rel (0) target = $region17
    $region16: #{tpu_custom_call.1} parent=1 // pred_region
      %40 = dma.done [#allocation3], 128
    $region17: #{tpu_custom_call.1} parent=1 // pred_fallthru
      _
    // Predicated region
    $region18: #{tpu_custom_call.1} parent=1 // pred_check
      _
    $region19: #{tpu_custom_call.1} parent=1 // pred_check_branch
      %42 = sbr.rel (0) target = $region21
    $region20: #{tpu_custom_call.1} parent=1 // pred_region
      %44 = dma.done [#allocation6], 2048
    $region21: #{tpu_custom_call.1} parent=1 // pred_fallthru
      _
    %p45 = scmp.eq.s32.totalorder 0, 0
    // Predicated region
    $region22: #{tpu_custom_call.1} parent=1 // pred_check
      %p46 = pneg %p45
    $region23: #{tpu_custom_call.1} parent=1 // pred_check_branch
      %48 = sbr.rel (%p46) target = $region25
    $region24: #{tpu_custom_call.1} parent=1 // pred_region
      %v49 = vld [vmem:[%s2] sm:$0x1]
      %v51 = vperm.slane %v49, 0
      %53 = vst [vmem:[#allocation7] sm:$0xff] %v51
    $region25: #{tpu_custom_call.1} parent=1 // pred_fallthru
      _
    %v54 = vld [vmem:[#allocation7] sm:$0xff]
    %v55 = vld [vmem:[#allocation2] sm:$0xff]
    %v56 = vld [vmem:[#allocation5] sm:$0xff]
    %v57 = vld [vmem:[#allocation5 + $0x8] sm:$0xff]
    %v58 = vld [vmem:[#allocation5 + $0x10] sm:$0xff]
    %v59 = vld [vmem:[#allocation5 + $0x18] sm:$0xff]
    %v60 = vld [vmem:[#allocation5 + $0x20] sm:$0xff]
    %v61 = vld [vmem:[#allocation5 + $0x28] sm:$0xff]
    %v62 = vld [vmem:[#allocation5 + $0x30] sm:$0xff]
    %v63 = vld [vmem:[#allocation5 + $0x38] sm:$0xff]
    %v64 = vld [vmem:[#allocation5 + $0x40] sm:$0xff]
    %v65 = vld [vmem:[#allocation5 + $0x48] sm:$0xff]
    %v66 = vld [vmem:[#allocation5 + $0x50] sm:$0xff]
    %v67 = vld [vmem:[#allocation5 + $0x58] sm:$0xff]
    %v68 = vld [vmem:[#allocation5 + $0x60] sm:$0xff]
    %v69 = vld [vmem:[#allocation5 + $0x68] sm:$0xff]
    %v70 = vld [vmem:[#allocation5 + $0x70] sm:$0xff]
    %v71 = vld [vmem:[#allocation5 + $0x78] sm:$0xff]
    %72 = vmatpush.msra.mxu0 %v71
    %73 = vmatpush.msra.mxu0 %v70
    %74 = vmatpush.msra.mxu0 %v69
    %75 = vmatpush.msra.mxu0 %v68
    %76 = vmatpush.msra.mxu0 %v67
    %77 = vmatpush.msra.mxu0 %v66
    %78 = vmatpush.msra.mxu0 %v65
    %79 = vmatpush.msra.mxu0 %v64
    %80 = vmatpush.msra.mxu0 %v63
    %81 = vmatpush.msra.mxu0 %v62
    %82 = vmatpush.msra.mxu0 %v61
    %83 = vmatpush.msra.mxu0 %v60
    %84 = vmatpush.msra.mxu0 %v59
    %85 = vmatpush.msra.mxu0 %v58
    %86 = vmatpush.msra.mxu0 %v57
    %87 = vmatpush.msra.mxu0 %v56
    %88 = vmatmul.f32.gmra.mxu0 %v55
    %v89 = vpop.f32.mrf.mxu0
    %v90 = vadd.f32 0.0, %v89
    %91 = vdwg.mxu0
    %v92 = vadd.f32 %v54, %v90
    %93 = vst [vmem:[#allocation7] sm:$0xff] %v92
    // Predicated region
    $region26: #{tpu_custom_call.1} parent=1 // pred_check
      _
    $region27: #{tpu_custom_call.1} parent=1 // pred_check_branch
      %95 = sbr.rel (0) target = $region29
    $region28: #{tpu_custom_call.1} parent=1 // pred_region
      %97 = vsyncadd [#allocation4], 0
      %s99 = sshll.u32 [#allocation7], 4
      %s100 = int_to_ptr.vmem [resolvable:$true] %s99
      %s101 = sshll.u32 %s3, 4
      %s102 = int_to_ptr.hbm [resolvable:$true] %s101
      %104 = dma.vmem_to_hbm [thread:$0]  %s100, 128, %s102, [#allocation4]
    $region29: #{tpu_custom_call.1} parent=1 // pred_fallthru
      _
    // Predicated region
    $region30: #{tpu_custom_call.1} parent=1 // pred_check
      _
    $region31: #{tpu_custom_call.1} parent=1 // pred_check_branch
      %106 = sbr.rel (0) target = $region33
    $region32: #{tpu_custom_call.1} parent=1 // pred_region
      %108 = dma.done [#allocation4], 128
    $region33: #{tpu_custom_call.1} parent=1 // pred_fallthru
      _
    %109 = vsyncpa [#allocation3], 1
    %110 = vsyncpa [#allocation6], 1
    %111 = vsyncpa [#allocation4], 1

</llo_original>
